<compile_context>
chip_gen: v6e
topology: v6e:2x2x1
jax: 0.10.0
libtpu: 0.0.40
codegen_flags: <defaults>
</compile_context>

<pallas_src>
import functools
import math

import jax
import jax.numpy as jnp
from jax.experimental import pallas as pl
from jax.experimental.pallas import tpu as pltpu

_SQRT_HALF = 1.0 / math.sqrt(2.0)


def _gelu_exact(x):
    # torch.nn.GELU() default = exact erf formulation (evaluated in f32).
    return 0.5 * x * (1.0 + jax.lax.erf(x * _SQRT_HALF))


# --------------------------------------------------------------------------
# Kernels
# --------------------------------------------------------------------------

def _mlp_kernel_resident(x_ref, w1_ref, b1_ref, w2_ref, b2_ref, o_ref):
    """Fast path: full weights resident in VMEM, one grid axis over row tiles.

    No accumulator scratch, no init/epilogue passes: a single fused
    fc1 -> GELU -> fc2 per row tile.
    """
    h = jnp.dot(x_ref[...], w1_ref[...], preferred_element_type=jnp.float32)
    h = _gelu_exact(h + b1_ref[...].astype(jnp.float32))
    # TODO(synk): dropout (p=0.0) is identity at inference; stochastic dropout not implemented.
    y = jnp.dot(h.astype(w2_ref.dtype), w2_ref[...],
                preferred_element_type=jnp.float32)
    o_ref[...] = (y + b2_ref[...].astype(jnp.float32)).astype(o_ref.dtype)


def _mlp_kernel_htiled(x_ref, w1_ref, b1_ref, w2_ref, b2_ref, o_ref, acc_ref):
    """Fallback path: hidden dimension tiled on the grid, f32 accumulator."""
    j = pl.program_id(1)

    @pl.when(j == 0)
    def _():
        acc_ref[...] = jnp.zeros_like(acc_ref)

    h = jnp.dot(x_ref[...], w1_ref[...], preferred_element_type=jnp.float32)
    h = _gelu_exact(h + b1_ref[...].astype(jnp.float32))
    acc_ref[...] += jnp.dot(h.astype(w2_ref.dtype), w2_ref[...],
                            preferred_element_type=jnp.float32)

    @pl.when(j == pl.num_programs(1) - 1)
    def _():
        o_ref[...] = (acc_ref[...] + b2_ref[...].astype(jnp.float32)
                      ).astype(o_ref.dtype)


# --------------------------------------------------------------------------
# Tiling / budgeting helpers
# --------------------------------------------------------------------------

def _round_up(x, m):
    return ((x + m - 1) // m) * m


def _sublane_pack(dtype):
    """Rows per packed sublane group: 8 (4-byte), 16 (2-byte), 32 (1-byte)."""
    itemsize = jnp.dtype(dtype).itemsize
    return 8 * max(1, 4 // itemsize)


def _vmem_budget_bytes():
    """Per-TensorCore VMEM budget: ~75% of physical capacity.

    Leaves headroom for Mosaic internal scratch / semaphores.  ≈48 MiB on a
    64 MiB v7x core, ≈96 MiB on 128 MiB v5e/v6e.  get_tpu_info() reports the
    per-core capacity, so the check is already per-TensorCore (megacore safe).
    """
    try:
        cap = int(pltpu.get_tpu_info().vmem_capacity_bytes)
    except Exception:
        cap = 64 * 1024 * 1024  # conservative per-core default (v7x-sized)
    return (cap * 3) // 4


def _resident_footprint(tm, d_in, h, d_out, xbytes, wbytes):
    x_tile = 2 * tm * d_in * xbytes                 # double-buffered x tile
    o_tile = 2 * tm * d_out * xbytes                # double-buffered out tile
    weights = (d_in * h + h * d_out + h + d_out) * wbytes   # single-buffered
    interm = tm * h * (4 + wbytes)                  # f32 hidden + cast for fc2
    return x_tile + o_tile + weights + interm


def _htiled_footprint(tm, th, d_in, h, d_out, xbytes, wbytes):
    x_tile = 2 * tm * d_in * xbytes
    o_tile = 2 * tm * d_out * xbytes
    w_slices = 2 * (d_in * th + th * d_out + th) * wbytes + d_out * wbytes
    acc = tm * d_out * 4
    interm = tm * th * (4 + wbytes)
    return x_tile + o_tile + w_slices + acc + interm


# --------------------------------------------------------------------------
# Wrapper
# --------------------------------------------------------------------------

def mlp_forward(x, w1, b1, w2, b2, *, tm=None, th=512,
                _force_hidden_tiling=False):
    """y = fc2(GELU(fc1(x))).  x: (..., D_in); w1: (D_in, H); w2: (H, D_out)."""
    orig_shape = x.shape
    D_in = orig_shape[-1]
    H = w1.shape[1]
    D_out = w2.shape[1]
    M = 1
    for s in orig_shape[:-1]:
        M *= s

    xbytes = jnp.dtype(x.dtype).itemsize
    wbytes = jnp.dtype(w1.dtype).itemsize
    budget = _vmem_budget_bytes()
    pack = _sublane_pack(x.dtype)

    b1_2d = b1.reshape(1, H)
    b2_2d = b2.reshape(1, D_out)

    flops = 2 * M * H * (D_in + D_out)
    bytes_accessed = (M * (D_in + D_out) * xbytes
                      + (D_in * H + H * D_out + H + D_out) * wbytes)
    cost = pl.CostEstimate(flops=flops, transcendentals=M * H,
                           bytes_accessed=bytes_accessed)

    # Constant blocks (index_map independent of the grid) -> single-buffered.
    const_spec = functools.partial(pl.BlockSpec, pipeline_mode=pl.Buffered(1))

    # ------------------------------------------------------------------
    # Fast path: full weight residency whenever it fits the VMEM budget.
    # ------------------------------------------------------------------
    tm_res = max(pack, min(256 if tm is None else tm, _round_up(M, pack)))
    resident = (not _force_hidden_tiling and
                _resident_footprint(tm_res, D_in, H, D_out, xbytes, wbytes)
                <= budget)
    while (not _force_hidden_tiling and not resident and tm_res > 128):
        tm_res = max(128, tm_res // 2)   # shrink rows, never below 128 (MXU)
        resident = (_resident_footprint(tm_res, D_in, H, D_out, xbytes, wbytes)
                    <= budget)

    if resident:
        tm_eff = tm_res
        M_pad = _round_up(M, tm_eff)
        x2d = x.reshape(M, D_in)
        if M_pad != M:
            x2d = jnp.pad(x2d, ((0, M_pad - M), (0, 0)))

        out2d = pl.pallas_call(
            _mlp_kernel_resident,
            out_shape=jax.ShapeDtypeStruct((M_pad, D_out), x.dtype),
            grid_spec=pltpu.PrefetchScalarGridSpec(
                num_scalar_prefetch=0,
                grid=(M_pad // tm_eff,),
                in_specs=[
                    pl.BlockSpec((tm_eff, D_in), lambda i: (i, 0)),
                    const_spec((D_in, H), lambda i: (0, 0)),
                    const_spec((1, H), lambda i: (0, 0)),
                    const_spec((H, D_out), lambda i: (0, 0)),
                    const_spec((1, D_out), lambda i: (0, 0)),
                ],
                out_specs=pl.BlockSpec((tm_eff, D_out), lambda i: (i, 0)),
            ),
            compiler_params=pltpu.CompilerParams(
                dimension_semantics=("parallel",),
                vmem_limit_bytes=budget,
            ),
            cost_estimate=cost,
        )(x2d, w1, b1_2d, w2, b2_2d)
        return out2d[:M].reshape(*orig_shape[:-1], D_out)

    # ------------------------------------------------------------------
    # Fallback: hidden-dim tiling on the grid (weights exceed VMEM budget).
    # Bigger row tile to divide redundant weight HBM traffic.
    # ------------------------------------------------------------------
    tm_eff = max(pack, min(512 if tm is None else tm, _round_up(M, pack)))
    th_eff = max(128, (min(th, max(H, 128)) // 128) * 128)
    while (th_eff > 128 and
           _htiled_footprint(tm_eff, th_eff, D_in, H, D_out, xbytes, wbytes)
           > budget):
        th_eff -= 128

    # Zero-pad H to a multiple of the hidden tile.  Exact: padded hidden units
    # see b1 = 0 -> gelu(0) = 0 -> contribute nothing to fc2.
    H_pad = _round_up(H, th_eff)
    if H_pad != H:
        w1p = jnp.pad(w1, ((0, 0), (0, H_pad - H)))
        b1p = jnp.pad(b1_2d, ((0, 0), (0, H_pad - H)))
        w2p = jnp.pad(w2, ((0, H_pad - H), (0, 0)))
    else:
        w1p, b1p, w2p = w1, b1_2d, w2

    M_pad = _round_up(M, tm_eff)
    x2d = x.reshape(M, D_in)
    if M_pad != M:
        x2d = jnp.pad(x2d, ((0, M_pad - M), (0, 0)))

    grid = (M_pad // tm_eff, H_pad // th_eff)

    out2d = pl.pallas_call(
        _mlp_kernel_htiled,
        out_shape=jax.ShapeDtypeStruct((M_pad, D_out), x.dtype),
        grid_spec=pltpu.PrefetchScalarGridSpec(
            num_scalar_prefetch=0,
            grid=grid,
            in_specs=[
                pl.BlockSpec((tm_eff, D_in), lambda i, j: (i, 0)),
                pl.BlockSpec((D_in, th_eff), lambda i, j: (0, j)),
                pl.BlockSpec((1, th_eff), lambda i, j: (0, j)),
                pl.BlockSpec((th_eff, D_out), lambda i, j: (j, 0)),
                const_spec((1, D_out), lambda i, j: (0, 0)),
            ],
            out_specs=pl.BlockSpec((tm_eff, D_out), lambda i, j: (i, 0)),
            scratch_shapes=[pltpu.VMEM((tm_eff, D_out), jnp.float32)],
        ),
        compiler_params=pltpu.CompilerParams(
            dimension_semantics=("parallel", "arbitrary"),
            vmem_limit_bytes=budget,
        ),
        cost_estimate=cost,
    )(x2d, w1p, b1p, w2p, b2_2d)

    return out2d[:M].reshape(*orig_shape[:-1], D_out)


# --------------------------------------------------------------------------
# Reference / init / test
# --------------------------------------------------------------------------

def _mlp_ref(x, w1, b1, w2, b2):
    """Pure-JAX reference (exact-erf GELU, matching torch.nn.GELU())."""
    D_in = x.shape[-1]
    h = x.reshape(-1, D_in) @ w1 + b1
    h = 0.5 * h * (1.0 + jax.lax.erf(h / math.sqrt(2.0)))
    y = h @ w2 + b2
    return y.reshape(*x.shape[:-1], -1)


def _init_params(key, in_features, hidden_features, out_features,
                 dtype=jnp.float32):
    """Deterministic init mirroring torch.nn.Linear (kaiming-uniform-ish)."""
    k1, k2, k3, k4 = jax.random.split(key, 4)
    bound1 = 1.0 / math.sqrt(in_features)
    bound2 = 1.0 / math.sqrt(hidden_features)
    # stored already transposed: (in, out)
    w1 = jax.random.uniform(k1, (in_features, hidden_features), dtype, -bound1, bound1)
    b1 = jax.random.uniform(k2, (hidden_features,), dtype, -bound1, bound1)
    w2 = jax.random.uniform(k3, (hidden_features, out_features), dtype, -bound2, bound2)
    b2 = jax.random.uniform(k4, (out_features,), dtype, -bound2, bound2)
    return w1, b1, w2, b2


if __name__ == "__main__":
    # Small ViT-like shapes: batch=2, seq=8, in_features=32, hidden=64.
    B, N, D_in = 2, 8, 32
    H = 64
    D_out = D_in

    key = jax.random.PRNGKey(0)
    kx, kp = jax.random.split(key)

    # --- float32, resident fast path (tight tolerance) ---
    x = jax.random.normal(kx, (B, N, D_in), dtype=jnp.float32)
    w1, b1, w2, b2 = _init_params(kp, D_in, H, D_out, dtype=jnp.float32)
    y = mlp_forward(x, w1, b1, w2, b2)
    jax.block_until_ready(y)
    ref = _mlp_ref(x, w1, b1, w2, b2)
    assert jnp.allclose(y, ref, atol=1e-4, rtol=1e-4), "f32 resident mismatch"

    # --- bfloat16, resident fast path (MXU-native, looser tolerance) ---
    xb, w1b, b1b, w2b, b2b = [a.astype(jnp.bfloat16) for a in (x, w1, b1, w2, b2)]
    yb = mlp_forward(xb, w1b, b1b, w2b, b2b)
    jax.block_until_ready(yb)
    refb = _mlp_ref(*[a.astype(jnp.float32) for a in (xb, w1b, b1b, w2b, b2b)])
    assert jnp.allclose(yb.astype(jnp.float32), refb, atol=5e-2, rtol=5e-2), \
        "bf16 resident mismatch"

    # --- float32, forced hidden-tiled fallback path (H=320 -> padded to 384,
    #     3 hidden tiles of 128: exercises accumulation + H padding) ---
    H2 = 320
    w1c, b1c, w2c, b2c = _init_params(kp, D_in, H2, D_out, dtype=jnp.float32)
    yt = mlp_forward(x, w1c, b1c, w2c, b2c, th=128, _force_hidden_tiling=True)
    jax.block_until_ready(yt)
    reft = _mlp_ref(x, w1c, b1c, w2c, b2c)
    assert jnp.allclose(yt, reft, atol=1e-4, rtol=1e-4), "f32 h-tiled mismatch"

    print("KERNEL_OK")
</pallas_src>

<mosaic_0001>
module attributes {stable_mosaic.version = 11 : i64} {
  func.func @_mlp_kernel_resident(%arg0: i32, %arg1: memref<16x32xf32, #tpu.memory_space<vmem>>, %arg2: memref<32x64xf32, #tpu.memory_space<vmem>>, %arg3: memref<1x64xf32, #tpu.memory_space<vmem>>, %arg4: memref<64x32xf32, #tpu.memory_space<vmem>>, %arg5: memref<1x32xf32, #tpu.memory_space<vmem>>, %arg6: memref<16x32xf32, #tpu.memory_space<vmem>>) attributes {dimension_semantics = [#tpu.dimension_semantics<parallel>], iteration_bounds = array<i64: 1>, scalar_prefetch = 0 : i64, scratch_operands = 0 : i64, tpu.core_type = #tpu.core_type<tc>, window_params = [{transform_indices = @transform_0, window_bounds = array<i64: 16, 32>}, {pipeline_mode = #tpu.pipeline_mode<synchronous>, transform_indices = @transform_1, window_bounds = array<i64: 32, 64>}, {pipeline_mode = #tpu.pipeline_mode<synchronous>, transform_indices = @transform_2, window_bounds = array<i64: 1, 64>}, {pipeline_mode = #tpu.pipeline_mode<synchronous>, transform_indices = @transform_3, window_bounds = array<i64: 64, 32>}, {pipeline_mode = #tpu.pipeline_mode<synchronous>, transform_indices = @transform_4, window_bounds = array<i64: 1, 32>}, {transform_indices = @transform_5, window_bounds = array<i64: 16, 32>}]} {
    %c0 = arith.constant 0 : index
    %c0_0 = arith.constant 0 : index
    %0 = vector.load %arg1[%c0, %c0_0] : memref<16x32xf32, #tpu.memory_space<vmem>>, vector<16x32xf32>
    %c0_1 = arith.constant 0 : index
    %c0_2 = arith.constant 0 : index
    %1 = vector.load %arg2[%c0_1, %c0_2] : memref<32x64xf32, #tpu.memory_space<vmem>>, vector<32x64xf32>
    %cst = arith.constant dense<0.000000e+00> : vector<16x64xf32>
    %2 = tpu.matmul %0, %1, %cst {dimension_numbers = #tpu.dot_dimension_numbers<[1], [0], [0], [1], [0, 0, 1, 1], [], []>} : vector<16x32xf32>, vector<32x64xf32>, vector<16x64xf32> -> vector<16x64xf32>
    %c0_3 = arith.constant 0 : index
    %c0_4 = arith.constant 0 : index
    %3 = vector.load %arg3[%c0_3, %c0_4] : memref<1x64xf32, #tpu.memory_space<vmem>>, vector<1x64xf32>
    %4 = vector.broadcast %3 : vector<1x64xf32> to vector<16x64xf32>
    %5 = arith.addf %2, %4 : vector<16x64xf32>
    %cst_5 = arith.constant 5.000000e-01 : f32
    %6 = vector.broadcast %cst_5 : f32 to vector<16x64xf32>
    %7 = arith.mulf %6, %5 : vector<16x64xf32>
    %cst_6 = arith.constant 0.707106769 : f32
    %8 = vector.broadcast %cst_6 : f32 to vector<16x64xf32>
    %9 = arith.mulf %5, %8 : vector<16x64xf32>
    %10 = math.erf %9 : vector<16x64xf32>
    %cst_7 = arith.constant 1.000000e+00 : f32
    %11 = vector.broadcast %cst_7 : f32 to vector<16x64xf32>
    %12 = arith.addf %11, %10 : vector<16x64xf32>
    %13 = arith.mulf %7, %12 : vector<16x64xf32>
    %c0_8 = arith.constant 0 : index
    %c0_9 = arith.constant 0 : index
    %14 = vector.load %arg4[%c0_8, %c0_9] : memref<64x32xf32, #tpu.memory_space<vmem>>, vector<64x32xf32>
    %cst_10 = arith.constant dense<0.000000e+00> : vector<16x32xf32>
    %15 = tpu.matmul %13, %14, %cst_10 {dimension_numbers = #tpu.dot_dimension_numbers<[1], [0], [0], [1], [0, 0, 1, 1], [], []>} : vector<16x64xf32>, vector<64x32xf32>, vector<16x32xf32> -> vector<16x32xf32>
    %c0_11 = arith.constant 0 : index
    %c0_12 = arith.constant 0 : index
    %16 = vector.load %arg5[%c0_11, %c0_12] : memref<1x32xf32, #tpu.memory_space<vmem>>, vector<1x32xf32>
    %17 = vector.broadcast %16 : vector<1x32xf32> to vector<16x32xf32>
    %18 = arith.addf %15, %17 : vector<16x32xf32>
    %c0_13 = arith.constant 0 : index
    %c0_14 = arith.constant 0 : index
    %19 = vector.load %arg6[%c0_13, %c0_14] : memref<16x32xf32, #tpu.memory_space<vmem>>, vector<16x32xf32>
    tpu.vector_store %arg6[%c0_13, %c0_14], %18 {strides = array<i32>} : memref<16x32xf32, #tpu.memory_space<vmem>>, vector<16x32xf32>,
    return
  }
  func.func @transform_0(%arg0: i32) -> (i32, i32) {
    %c0_i32 = arith.constant 0 : i32
    %c0_i32_0 = arith.constant 0 : i32
    return %arg0, %c0_i32 : i32, i32
  }
  func.func @transform_1(%arg0: i32) -> (i32, i32) {
    %c0_i32 = arith.constant 0 : i32
    %c0_i32_0 = arith.constant 0 : i32
    %c0_i32_1 = arith.constant 0 : i32
    return %c0_i32, %c0_i32_0 : i32, i32
  }
  func.func @transform_2(%arg0: i32) -> (i32, i32) {
    %c0_i32 = arith.constant 0 : i32
    %c0_i32_0 = arith.constant 0 : i32
    %c0_i32_1 = arith.constant 0 : i32
    return %c0_i32, %c0_i32_0 : i32, i32
  }
  func.func @transform_3(%arg0: i32) -> (i32, i32) {
    %c0_i32 = arith.constant 0 : i32
    %c0_i32_0 = arith.constant 0 : i32
    %c0_i32_1 = arith.constant 0 : i32
    return %c0_i32, %c0_i32_0 : i32, i32
  }
  func.func @transform_4(%arg0: i32) -> (i32, i32) {
    %c0_i32 = arith.constant 0 : i32
    %c0_i32_0 = arith.constant 0 : i32
    %c0_i32_1 = arith.constant 0 : i32
    return %c0_i32, %c0_i32_0 : i32, i32
  }
  func.func @transform_5(%arg0: i32) -> (i32, i32) {
    %c0_i32 = arith.constant 0 : i32
    %c0_i32_0 = arith.constant 0 : i32
    return %arg0, %c0_i32 : i32, i32
  }
}

</mosaic_0001>

<llo_original>
// kernel: tpu_custom_call.1
$region0: #{tpu_custom_call.1}
  #allocation0 [shape = 'u32[]', space=smem, size = 0x4, offset = 0x4, fixed_abs, tag = 'smem constant byte address 0x4 - core index']
  #allocation1 [shape = 'u32[144,128]{1,0:T(1,128)}', space=vmem, size = 0x12000, scoped, tag = 'internal scratch']
  %s0 = inlined_call_operand.vmem [shape: f32[16,32], index: 0, kind: input, shape index: {}]
  %s1 = inlined_call_operand.vmem [shape: f32[32,64], index: 1, kind: input, shape index: {}]
  %s2 = inlined_call_operand.vmem [shape: f32[1,64], index: 2, kind: input, shape index: {}]
  %s3 = inlined_call_operand.vmem [shape: f32[64,32], index: 3, kind: input, shape index: {}]
  %s4 = inlined_call_operand.vmem [shape: f32[1,32], index: 4, kind: input, shape index: {}]
  %s5 = inlined_call_operand.hbm [shape: f32[16,32], index: 5, kind: output, shape index: {}]
  %s6 = sld [smem:[#allocation0]]
  $region30: #{tpu_custom_call.1} parent=0
    _
  %s8 = ssub.s32 1, %s6
  %s9 = scalar_select 0, %s8, %s6
  $region1: #{tpu_custom_call.1} parent=0
    #allocation2 [shape = 'u8[8192]{0}', space=vmem, size = 0x2000, scoped, tag = 'output window, operand 0, single buffered']
    #allocation3 [shape = 's32[1]{0}', space=sflag, size = 0x4, scoped, tag = 'scoped memory for tpu_custom_call.1']
    %10 = vsyncpa [#allocation3], 0
    // Predicated region
    $region2: #{tpu_custom_call.1} parent=1 // pred_check
      _
    $region3: #{tpu_custom_call.1} parent=1 // pred_check_branch
      %12 = sbr.rel (0) target = $region5
    $region4: #{tpu_custom_call.1} parent=1 // pred_region
      _
    $region5: #{tpu_custom_call.1} parent=1 // pred_fallthru
      _
    // Predicated region
    $region6: #{tpu_custom_call.1} parent=1 // pred_check
      _
    $region7: #{tpu_custom_call.1} parent=1 // pred_check_branch
      %14 = sbr.rel (0) target = $region9
    $region8: #{tpu_custom_call.1} parent=1 // pred_region
      _
    $region9: #{tpu_custom_call.1} parent=1 // pred_fallthru
      _
    // Predicated region
    $region10: #{tpu_custom_call.1} parent=1 // pred_check
      _
    $region11: #{tpu_custom_call.1} parent=1 // pred_check_branch
      %16 = sbr.rel (0) target = $region13
    $region12: #{tpu_custom_call.1} parent=1 // pred_region
      _
    $region13: #{tpu_custom_call.1} parent=1 // pred_fallthru
      _
    // Predicated region
    $region14: #{tpu_custom_call.1} parent=1 // pred_check
      _
    $region15: #{tpu_custom_call.1} parent=1 // pred_check_branch
      %18 = sbr.rel (0) target = $region17
    $region16: #{tpu_custom_call.1} parent=1 // pred_region
      _
    $region17: #{tpu_custom_call.1} parent=1 // pred_fallthru
      _
    // Predicated region
    $region18: #{tpu_custom_call.1} parent=1 // pred_check
      _
    $region19: #{tpu_custom_call.1} parent=1 // pred_check_branch
      %20 = sbr.rel (0) target = $region21
    $region20: #{tpu_custom_call.1} parent=1 // pred_region
      _
    $region21: #{tpu_custom_call.1} parent=1 // pred_fallthru
      _
    %v21 = vld [vmem:[%s0] sm:$0xff]
    %v22 = vld [vmem:[%s0 + $0x8] sm:$0xff]
    %v23 = vld [vmem:[%s1] sm:$0xff]
    %v24 = vld [vmem:[%s1 + $0x8] sm:$0xff]
    %v25 = vld [vmem:[%s1 + $0x10] sm:$0xff]
    %v26 = vld [vmem:[%s1 + $0x18] sm:$0xff]
    %v27 = vld [vmem:[%s2] sm:$0x1]
    %v29 = vlaneseq
    %v30 = vshrl.u32 %v29, 7
    %v31 = vsub.s32 0, %v30
    %v32 = vrot.slane %v27, %v31
    %vm34 = vcmask 261120
    %v36 = vsel %vm34, %v21, 0
    %v39 = vsel %vm34, %v22, 0
    %41 = vmatprep.subr.mxu0 0.0
    %42 = vmatpush1.msra.mxu0 0.0
    %43 = vmatprep.subr.mxu0 0.0
    %44 = vmatpush1.msra.mxu0 0.0
    %45 = vmatprep.subr.mxu0 0.0
    %46 = vmatpush1.msra.mxu0 0.0
    %47 = vmatprep.subr.mxu0 0.0
    %48 = vmatpush1.msra.mxu0 0.0
    %49 = vmatprep.subr.mxu0 0.0
    %50 = vmatpush1.msra.mxu0 0.0
    %51 = vmatprep.subr.mxu0 0.0
    %52 = vmatpush1.msra.mxu0 0.0
    %53 = vmatprep.subr.mxu0 0.0
    %54 = vmatpush1.msra.mxu0 0.0
    %55 = vmatprep.subr.mxu0 0.0
    %56 = vmatpush1.msra.mxu0 0.0
    %57 = vmatprep.subr.mxu0 0.0
    %58 = vmatpush1.msra.mxu0 0.0
    %59 = vmatprep.subr.mxu0 0.0
    %60 = vmatpush1.msra.mxu0 0.0
    %61 = vmatprep.subr.mxu0 0.0
    %62 = vmatpush1.msra.mxu0 0.0
    %63 = vmatprep.subr.mxu0 0.0
    %64 = vmatpush1.msra.mxu0 0.0
    %65 = vmatprep.subr.mxu0 0.0
    %66 = vmatpush1.msra.mxu0 %v26
    %67 = vmatprep.subr.mxu0 0.0
    %68 = vmatpush1.msra.mxu0 %v25
    %69 = vmatprep.subr.mxu0 0.0
    %70 = vmatpush1.msra.mxu0 %v24
    %71 = vmatprep.subr.mxu0 0.0
    %72 = vmatpush1.msra.mxu0 %v23
    %73 = vmatprep.subr.mxu0 0.0
    %74 = vmatpush2.msra.mxu0 0.0
    %75 = vmatprep.subr.mxu0 0.0
    %76 = vmatpush2.msra.mxu0 0.0
    %77 = vmatprep.subr.mxu0 0.0
    %78 = vmatpush2.msra.mxu0 0.0
    %79 = vmatprep.subr.mxu0 0.0
    %80 = vmatpush2.msra.mxu0 0.0
    %81 = vmatprep.subr.mxu0 0.0
    %82 = vmatpush2.msra.mxu0 0.0
    %83 = vmatprep.subr.mxu0 0.0
    %84 = vmatpush2.msra.mxu0 0.0
    %85 = vmatprep.subr.mxu0 0.0
    %86 = vmatpush2.msra.mxu0 0.0
    %87 = vmatprep.subr.mxu0 0.0
    %88 = vmatpush2.msra.mxu0 0.0
    %89 = vmatprep.subr.mxu0 0.0
    %90 = vmatpush2.msra.mxu0 0.0
    %91 = vmatprep.subr.mxu0 0.0
    %92 = vmatpush2.msra.mxu0 0.0
    %93 = vmatprep.subr.mxu0 0.0
    %94 = vmatpush2.msra.mxu0 0.0
    %95 = vmatprep.subr.mxu0 0.0
    %96 = vmatpush2.msra.mxu0 0.0
    %97 = vmatprep.subr.mxu0 0.0
    %98 = vmatpush2.msra.mxu0 0.0
    %99 = vmatprep.subr.mxu0 0.0
    %100 = vmatpush2.msra.mxu0 0.0
    %101 = vmatprep.subr.mxu0 0.0
    %102 = vmatpush2.msra.mxu0 0.0
    %103 = vmatprep.subr.mxu0 0.0
    %104 = vmatpush2.msra.mxu0 0.0
    %105 = vmatprep.mubr.f32.mxu0 0.0
    %106 = vmatmul.mubr.f32.gmra.mxu0 %v36
    %v107 = vpop.f32.mrf.mxu0
    %v108 = vadd.f32 %v32, %v107
    %v109 = vpop.f32.mrf.mxu0
    %110 = vmatprep.mubr.f32.mxu0 0.0
    %111 = vmatmul.mubr.f32.gmra.mxu0 %v39
    %v112 = vpop.f32.mrf.mxu0
    %v113 = vadd.f32 %v32, %v112
    %v114 = vpop.f32.mrf.mxu0
    %115 = vdwg.mxu0
    %v116 = vmul.f32 %v108, 0.5
    %v117 = vmul.f32 %v113, 0.5
    %v118 = vmul.f32 %v108, 0.70710677
    %v119 = vmul.f32 %v113, 0.70710677
    %v120 = verf.f32.pop %v118
    %v121 = verf.f32.pop %v119
    %v122 = vadd.f32 %v120, 1.0
    %v123 = vadd.f32 %v121, 1.0
    %v124 = vmul.f32 %v116, %v122
    %v125 = vmul.f32 %v117, %v123
    %v126 = vld [vmem:[%s3] sm:$0xff]
    %v127 = vld [vmem:[%s3 + $0x8] sm:$0xff]
    %v128 = vld [vmem:[%s3 + $0x10] sm:$0xff]
    %v129 = vld [vmem:[%s3 + $0x18] sm:$0xff]
    %v130 = vld [vmem:[%s3 + $0x20] sm:$0xff]
    %v131 = vld [vmem:[%s3 + $0x28] sm:$0xff]
    %v132 = vld [vmem:[%s3 + $0x30] sm:$0xff]
    %v133 = vld [vmem:[%s3 + $0x38] sm:$0xff]
    %v134 = vld [vmem:[%s4] sm:$0x1]
    %v136 = vlaneseq
    %v137 = vshrl.u32 %v136, 7
    %v138 = vsub.s32 0, %v137
    %v139 = vrot.slane %v134, %v138
    %vm141 = vcmask 523264
    %v143 = vsel %vm141, %v124, 0
    %v146 = vsel %vm141, %v125, 0
    %148 = vmatprep.subr.mxu0 0.0
    %149 = vmatpush1.msra.mxu0 0.0
    %150 = vmatprep.subr.mxu0 0.0
    %151 = vmatpush1.msra.mxu0 0.0
    %152 = vmatprep.subr.mxu0 0.0
    %153 = vmatpush1.msra.mxu0 0.0
    %154 = vmatprep.subr.mxu0 0.0
    %155 = vmatpush1.msra.mxu0 0.0
    %156 = vmatprep.subr.mxu0 0.0
    %157 = vmatpush1.msra.mxu0 0.0
    %158 = vmatprep.subr.mxu0 0.0
    %159 = vmatpush1.msra.mxu0 0.0
    %160 = vmatprep.subr.mxu0 0.0
    %161 = vmatpush1.msra.mxu0 0.0
    %162 = vmatprep.subr.mxu0 0.0
    %163 = vmatpush1.msra.mxu0 0.0
    %164 = vmatprep.subr.mxu0 0.0
    %165 = vmatpush1.msra.mxu0 %v133
    %166 = vmatprep.subr.mxu0 0.0
    %167 = vmatpush1.msra.mxu0 %v132
    %168 = vmatprep.subr.mxu0 0.0
    %169 = vmatpush1.msra.mxu0 %v131
    %170 = vmatprep.subr.mxu0 0.0
    %171 = vmatpush1.msra.mxu0 %v130
    %172 = vmatprep.subr.mxu0 0.0
    %173 = vmatpush1.msra.mxu0 %v129
    %174 = vmatprep.subr.mxu0 0.0
    %175 = vmatpush1.msra.mxu0 %v128
    %176 = vmatprep.subr.mxu0 0.0
    %177 = vmatpush1.msra.mxu0 %v127
    %178 = vmatprep.subr.mxu0 0.0
    %179 = vmatpush1.msra.mxu0 %v126
    %180 = vmatprep.subr.mxu0 0.0
    %181 = vmatpush2.msra.mxu0 0.0
    %182 = vmatprep.subr.mxu0 0.0
    %183 = vmatpush2.msra.mxu0 0.0
    %184 = vmatprep.subr.mxu0 0.0
    %185 = vmatpush2.msra.mxu0 0.0
    %186 = vmatprep.subr.mxu0 0.0
    %187 = vmatpush2.msra.mxu0 0.0
    %188 = vmatprep.subr.mxu0 0.0
    %189 = vmatpush2.msra.mxu0 0.0
    %190 = vmatprep.subr.mxu0 0.0
    %191 = vmatpush2.msra.mxu0 0.0
    %192 = vmatprep.subr.mxu0 0.0
    %193 = vmatpush2.msra.mxu0 0.0
    %194 = vmatprep.subr.mxu0 0.0
    %195 = vmatpush2.msra.mxu0 0.0
    %196 = vmatprep.subr.mxu0 0.0
    %197 = vmatpush2.msra.mxu0 0.0
    %198 = vmatprep.subr.mxu0 0.0
    %199 = vmatpush2.msra.mxu0 0.0
    %200 = vmatprep.subr.mxu0 0.0
    %201 = vmatpush2.msra.mxu0 0.0
    %202 = vmatprep.subr.mxu0 0.0
    %203 = vmatpush2.msra.mxu0 0.0
    %204 = vmatprep.subr.mxu0 0.0
    %205 = vmatpush2.msra.mxu0 0.0
    %206 = vmatprep.subr.mxu0 0.0
    %207 = vmatpush2.msra.mxu0 0.0
    %208 = vmatprep.subr.mxu0 0.0
    %209 = vmatpush2.msra.mxu0 0.0
    %210 = vmatprep.subr.mxu0 0.0
    %211 = vmatpush2.msra.mxu0 0.0
    %212 = vmatprep.mubr.f32.mxu0 0.0
    %213 = vmatmul.mubr.f32.gmra.mxu0 %v143
    %v214 = vpop.f32.mrf.mxu0
    %v215 = vadd.f32 %v139, %v214
    %v216 = vpop.f32.mrf.mxu0
    %217 = vmatprep.mubr.f32.mxu0 0.0
    %218 = vmatmul.mubr.f32.gmra.mxu0 %v146
    %v219 = vpop.f32.mrf.mxu0
    %v220 = vadd.f32 %v139, %v219
    %v221 = vpop.f32.mrf.mxu0
    %222 = vdwg.mxu0
    %223 = vst.msk [vmem:[#allocation2] sm:$0xff] %vm34, %v215
    %224 = vst.msk [vmem:[#allocation2 + $0x8] sm:$0xff] %vm34, %v220
    // Predicated region
    $region22: #{tpu_custom_call.1} parent=1 // pred_check
      _
    $region23: #{tpu_custom_call.1} parent=1 // pred_check_branch
      %226 = sbr.rel (0) target = $region25
    $region24: #{tpu_custom_call.1} parent=1 // pred_region
      %s228 = ssub.s32 256, 256
      %229 = vsyncadd [#allocation3], %s228
      %s230 = sshll.u32 [#allocation2], 4
      %s231 = int_to_ptr.vmem [resolvable:$true] %s230
      %236 = dma.vmem_to_hbm [thread:$0]  %s231, 256, %s5, [#allocation3], 128, 128, 8
    $region25: #{tpu_custom_call.1} parent=1 // pred_fallthru
      _
    // Predicated region
    $region26: #{tpu_custom_call.1} parent=1 // pred_check
      _
    $region27: #{tpu_custom_call.1} parent=1 // pred_check_branch
      %238 = sbr.rel (0) target = $region29
    $region28: #{tpu_custom_call.1} parent=1 // pred_region
      %239 = dma.done [#allocation3], 256
    $region29: #{tpu_custom_call.1} parent=1 // pred_fallthru
      _
    %240 = vsyncpa [#allocation3], 1

</llo_original>
